<compile_context>
chip_gen: v7x
topology: tpu7x:2x2x1
jax: 0.10.0
libtpu: 0.0.40
codegen_flags: <defaults>
</compile_context>

<pallas_src>
import functools

import jax
import jax.numpy as jnp
from jax import lax
from jax.experimental import pallas as pl
from jax.experimental.pallas import tpu as pltpu

EPS = 1e-5  # PyTorch default eps for both BatchNorm1d and LayerNorm


# --------------------------------------------------------------------------
# Tiling helpers
# --------------------------------------------------------------------------
def _round_up(x, m):
    return ((x + m - 1) // m) * m


def _sublane_multiple(dtype):
    # f32 -> 8, bf16 -> 16, int8/fp8 -> 32 (sub-32-bit dtypes pack along sublanes)
    return 8 * (4 // jnp.dtype(dtype).itemsize)


def _choose_block_rows(n, f, dtype, *, tile_bytes=1 << 20, min_steps=8):
    """Row-tile size: ~1 MiB input tiles, >= `min_steps` grid steps once the input
    is large enough (>= min_steps/2 per core under v7x megacore), one step for tiny
    inputs.  ~1 MiB is the measured streaming-roofline plateau; more-but-smaller
    steps give the BlockSpec double-buffer a steady state that hides DMA."""
    mult = _sublane_multiple(dtype)
    row_bytes = max(1, f * jnp.dtype(dtype).itemsize)
    n_up = _round_up(max(n, 1), mult)
    cap_rows = max(mult, ((tile_bytes // row_bytes) // mult) * mult)
    if n_up <= cap_rows:                       # tiny input: a single grid step
        return n_up
    block = min(cap_rows, max(mult, _round_up(pl.cdiv(n_up, min_steps), mult)))
    return block


def _vmem_limit(block_rows, f, dtype):
    """Scoped-VMEM request: double-buffered I/O tiles + in-kernel f32 temporaries."""
    io = 4 * block_rows * f * jnp.dtype(dtype).itemsize   # in + out tile, x2 buffers
    tmp = 4 * block_rows * f * 4                          # f32 upcast / centered copies
    params = 32 * f * 4                                   # gamma/beta/scale/shift/partials
    need = io + tmp + params + (2 << 20)
    # Floor at the 16 MiB scoped default; stay <= ~28 MiB so both v7x cores
    # (64 MiB physical VMEM) can run concurrently, unless a tile truly needs more.
    return int(max(min(max(need, 16 << 20), 28 << 20), need))


# --------------------------------------------------------------------------
# LayerNorm: normalize each row over the feature axis (axis=-1).
# Rows are independent, so the ragged last tile needs no masking: garbage rows
# are computed but their HBM writeback is clipped to the true N.
# --------------------------------------------------------------------------
def _layernorm_kernel(x_ref, g_ref, b_ref, o_ref):
    x = x_ref[...].astype(jnp.float32)
    g = g_ref[...]            # (1, F) f32, resident in VMEM
    b = b_ref[...]            # (1, F) f32
    mean = jnp.mean(x, axis=-1, keepdims=True)
    xc = x - mean
    var = jnp.mean(xc * xc, axis=-1, keepdims=True)
    inv = lax.rsqrt(var + EPS)
    o_ref[...] = (xc * (inv * g) + b).astype(o_ref.dtype)


def layernorm_pallas(x, gamma, beta):
    n, f = x.shape
    block_rows = _choose_block_rows(n, f, x.dtype)
    n_tiles = pl.cdiv(n, block_rows)
    g2 = gamma.reshape(1, f).astype(jnp.float32)
    b2 = beta.reshape(1, f).astype(jnp.float32)

    return pl.pallas_call(
        _layernorm_kernel,
        out_shape=jax.ShapeDtypeStruct((n, f), x.dtype),
        grid_spec=pltpu.PrefetchScalarGridSpec(
            num_scalar_prefetch=0,
            grid=(n_tiles,),
            in_specs=[
                pl.BlockSpec((block_rows, f), lambda i: (i, 0)),
                pl.BlockSpec(memory_space=pltpu.MemorySpace.VMEM),  # gamma, untiled
                pl.BlockSpec(memory_space=pltpu.MemorySpace.VMEM),  # beta,  untiled
            ],
            out_specs=pl.BlockSpec((block_rows, f), lambda i: (i, 0)),
        ),
        compiler_params=pltpu.CompilerParams(
            dimension_semantics=("parallel",),
            vmem_limit_bytes=_vmem_limit(block_rows, f, x.dtype),
        ),
    )(x, g2, b2)


# --------------------------------------------------------------------------
# BatchNorm1d (training-mode biased batch statistics over axis 0, per feature).
# Single fused pallas_call, grid = (2, n_tiles):
#   phase 0: masked per-tile sum / sum-sq into (8, F) sublane partials (pure VALU),
#            final step does the cross-sublane reduce and writes the fused affine
#            scale = gamma*rsqrt(var+eps), shift = beta - mean*scale into scratch.
#   phase 1: lane-dense y = x*scale + shift over the same row tiles.
# For n_tiles == 1 the x block index is identical in both phases, so x is read
# from HBM exactly once; scale/shift never touch HBM.
# --------------------------------------------------------------------------
def _bn_fused_kernel(x_ref, g_ref, b_ref, o_ref,
                     sum_ref, sq_ref, scale_ref, shift_ref,
                     *, n_rows, block_rows):
    phase = pl.program_id(0)
    i = pl.program_id(1)

    @pl.when(phase == 0)
    def _stats():
        @pl.when(i == 0)
        def _():
            sum_ref[...] = jnp.zeros_like(sum_ref)
            sq_ref[...] = jnp.zeros_like(sq_ref)

        x = x_ref[...].astype(jnp.float32)
        # Mask rows past the true N (ragged last tile: the OOB rows are undefined).
        row = lax.broadcasted_iota(jnp.int32, x.shape, 0)
        xm = jnp.where(i * block_rows + row < n_rows, x, 0.0)
        # (block_rows, F) -> (block_rows//8, 8, F): per-sublane partials, pure VALU adds.
        xs = xm.reshape(block_rows // 8, 8, xm.shape[-1])
        sum_ref[...] += jnp.sum(xs, axis=0)
        sq_ref[...] += jnp.sum(xs * xs, axis=0)

        @pl.when(i == pl.num_programs(1) - 1)
        def _finalize():
            inv_n = 1.0 / n_rows
            s = jnp.sum(sum_ref[...], axis=0, keepdims=True)    # one XLU reduce total
            ss = jnp.sum(sq_ref[...], axis=0, keepdims=True)
            mean = s * inv_n
            var = jnp.maximum(ss * inv_n - mean * mean, 0.0)    # biased variance
            a = g_ref[...] * lax.rsqrt(var + EPS)
            scale_ref[...] = a
            shift_ref[...] = b_ref[...] - mean * a

    @pl.when(phase == 1)
    def _apply():
        x = x_ref[...].astype(jnp.float32)
        o_ref[...] = (x * scale_ref[...] + shift_ref[...]).astype(o_ref.dtype)


def batchnorm_pallas(x, gamma, beta):
    n, f = x.shape
    block_rows = _choose_block_rows(n, f, x.dtype)
    n_tiles = pl.cdiv(n, block_rows)
    g2 = gamma.reshape(1, f).astype(jnp.float32)
    b2 = beta.reshape(1, f).astype(jnp.float32)

    kernel = functools.partial(_bn_fused_kernel, n_rows=n, block_rows=block_rows)

    return pl.pallas_call(
        kernel,
        out_shape=jax.ShapeDtypeStruct((n, f), x.dtype),
        grid_spec=pltpu.PrefetchScalarGridSpec(
            num_scalar_prefetch=0,
            grid=(2, n_tiles),
            in_specs=[
                pl.BlockSpec((block_rows, f), lambda p, i: (i, 0)),
                pl.BlockSpec(memory_space=pltpu.MemorySpace.VMEM),  # gamma
                pl.BlockSpec(memory_space=pltpu.MemorySpace.VMEM),  # beta
            ],
            # Phase 0 parks the output on block 0 (no HBM writeback: the index only
            # changes after phase 1 has filled it); phase 1 visits each block once.
            out_specs=pl.BlockSpec((block_rows, f), lambda p, i: (i * p, 0)),
            scratch_shapes=[
                pltpu.VMEM((8, f), jnp.float32),   # sum partials
                pltpu.VMEM((8, f), jnp.float32),   # sum-of-squares partials
                pltpu.VMEM((1, f), jnp.float32),   # fused scale
                pltpu.VMEM((1, f), jnp.float32),   # fused shift
            ],
        ),
        compiler_params=pltpu.CompilerParams(
            # Phase 1 depends on phase 0's scratch, and the stats accumulation is a
            # reduction over row tiles -> both axes sequential.
            dimension_semantics=("arbitrary", "arbitrary"),
            vmem_limit_bytes=_vmem_limit(block_rows, f, x.dtype),
        ),
    )(x, g2, b2)


# --------------------------------------------------------------------------
# Python-side module equivalent
# --------------------------------------------------------------------------
class NormalizationPallas:
    """Mirror of the PyTorch Normalization wrapper, backed by Pallas kernels."""

    def __init__(self, norm, filters):
        self.norm = norm
        self.filters = filters
        if norm in ("batch", "layer"):
            # Faithful PyTorch init: gamma=1, beta=0 (can be overwritten by caller).
            self.gamma = jnp.ones((filters,), jnp.float32)
            self.beta = jnp.zeros((filters,), jnp.float32)
        elif norm is None:
            self.gamma = None
            self.beta = None
        else:
            raise ValueError(f"{norm} is not a valid normalization")

    def __call__(self, x):
        if self.norm == "layer":
            return layernorm_pallas(x, self.gamma, self.beta)
        elif self.norm == "batch":
            return batchnorm_pallas(x, self.gamma, self.beta)
        else:
            # nn.Identity(): a no-op.  No kernel -- avoids a pointless HBM round trip.
            return x


# --------------------------------------------------------------------------
# Pure-JAX references for validation
# --------------------------------------------------------------------------
def _layernorm_ref(x, g, b):
    x32 = x.astype(jnp.float32)
    mean = jnp.mean(x32, axis=-1, keepdims=True)
    var = jnp.mean((x32 - mean) ** 2, axis=-1, keepdims=True)
    return ((x32 - mean) * lax.rsqrt(var + EPS) * g + b).astype(x.dtype)


def _batchnorm_ref(x, g, b):
    x32 = x.astype(jnp.float32)
    mean = jnp.mean(x32, axis=0, keepdims=True)
    var = jnp.mean((x32 - mean) ** 2, axis=0, keepdims=True)
    return ((x32 - mean) * lax.rsqrt(var + EPS) * g + b).astype(x.dtype)


if __name__ == "__main__":
    key = jax.random.PRNGKey(0)
    k1, k2, k3, kg, kb = jax.random.split(key, 5)

    # ---- primary small test: (N=64 nodes, FILTERS=128) ----
    N, FILTERS = 64, 128
    x = jax.random.normal(k1, (N, FILTERS), jnp.float32)
    gamma = 1.0 + 0.1 * jax.random.normal(kg, (FILTERS,), jnp.float32)
    beta = 0.1 * jax.random.normal(kb, (FILTERS,), jnp.float32)

    ln_mod = NormalizationPallas("layer", FILTERS)
    ln_mod.gamma, ln_mod.beta = gamma, beta
    y_ln = jax.block_until_ready(ln_mod(x))
    assert jnp.allclose(y_ln, _layernorm_ref(x, gamma, beta), atol=1e-4, rtol=1e-4)

    bn_mod = NormalizationPallas("batch", FILTERS)
    bn_mod.gamma, bn_mod.beta = gamma, beta
    y_bn = jax.block_until_ready(bn_mod(x))
    assert jnp.allclose(y_bn, _batchnorm_ref(x, gamma, beta), atol=1e-4, rtol=1e-4)

    id_mod = NormalizationPallas(None, FILTERS)
    y_id = jax.block_until_ready(id_mod(x))
    assert jnp.array_equal(y_id, x)

    # ---- ragged rows / non-128 feature width (in-kernel mask + masked lane stores) ----
    N2, F2 = 50, 96
    x2 = jax.random.normal(k2, (N2, F2), jnp.float32)
    g2 = 1.0 + 0.05 * jax.random.normal(kg, (F2,), jnp.float32)
    b2 = 0.05 * jax.random.normal(kb, (F2,), jnp.float32)
    y2_ln = jax.block_until_ready(layernorm_pallas(x2, g2, b2))
    assert jnp.allclose(y2_ln, _layernorm_ref(x2, g2, b2), atol=1e-4, rtol=1e-4)
    y2_bn = jax.block_until_ready(batchnorm_pallas(x2, g2, b2))
    assert jnp.allclose(y2_bn, _batchnorm_ref(x2, g2, b2), atol=1e-4, rtol=1e-4)

    # ---- multi-tile grid with a ragged last row tile (masked BN stats path) ----
    N3, F3 = 3000, 128
    x3 = jax.random.normal(k3, (N3, F3), jnp.float32) + 0.5
    g3 = jnp.ones((F3,), jnp.float32)
    b3 = jnp.zeros((F3,), jnp.float32)
    y3_ln = jax.block_until_ready(layernorm_pallas(x3, g3, b3))
    assert jnp.allclose(y3_ln, _layernorm_ref(x3, g3, b3), atol=1e-4, rtol=1e-4)
    y3_bn = jax.block_until_ready(batchnorm_pallas(x3, g3, b3))
    assert jnp.allclose(y3_bn, _batchnorm_ref(x3, g3, b3), atol=1e-4, rtol=1e-4)

    print("KERNEL_OK")
</pallas_src>

<mosaic_0001>
module attributes {stable_mosaic.version = 11 : i64} {
  func.func @_layernorm_kernel(%arg0: i32, %arg1: memref<64x128xf32, #tpu.memory_space<vmem>>, %arg2: memref<1x128xf32, #tpu.memory_space<vmem>>, %arg3: memref<1x128xf32, #tpu.memory_space<vmem>>, %arg4: memref<64x128xf32, #tpu.memory_space<vmem>>) attributes {dimension_semantics = [#tpu.dimension_semantics<parallel>], iteration_bounds = array<i64: 1>, scalar_prefetch = 0 : i64, scratch_operands = 0 : i64, tpu.core_type = #tpu.core_type<tc>, window_params = [{transform_indices = @transform_0, window_bounds = array<i64: 64, 128>}, {pipeline_mode = #tpu.pipeline_mode<synchronous>, transform_indices = @transform_1, window_bounds = array<i64: 1, 128>}, {pipeline_mode = #tpu.pipeline_mode<synchronous>, transform_indices = @transform_2, window_bounds = array<i64: 1, 128>}, {transform_indices = @transform_3, window_bounds = array<i64: 64, 128>}]} {
    %c0 = arith.constant 0 : index
    %c0_0 = arith.constant 0 : index
    %0 = vector.load %arg1[%c0, %c0_0] : memref<64x128xf32, #tpu.memory_space<vmem>>, vector<64x128xf32>
    %c0_1 = arith.constant 0 : index
    %c0_2 = arith.constant 0 : index
    %1 = vector.load %arg2[%c0_1, %c0_2] : memref<1x128xf32, #tpu.memory_space<vmem>>, vector<1x128xf32>
    %c0_3 = arith.constant 0 : index
    %c0_4 = arith.constant 0 : index
    %2 = vector.load %arg3[%c0_3, %c0_4] : memref<1x128xf32, #tpu.memory_space<vmem>>, vector<1x128xf32>
    %cst = arith.constant dense<0.000000e+00> : vector<64xf32>
    %3 = vector.multi_reduction <add>, %0, %cst [1] : vector<64x128xf32> to vector<64xf32>
    %4 = vector.shape_cast %3 : vector<64xf32> to vector<64x1xf32>
    %cst_5 = arith.constant 1.280000e+02 : f32
    %5 = vector.broadcast %cst_5 : f32 to vector<64x1xf32>
    %6 = arith.divf %4, %5 : vector<64x1xf32>
    %7 = vector.broadcast %6 : vector<64x1xf32> to vector<64x128xf32>
    %8 = arith.subf %0, %7 : vector<64x128xf32>
    %9 = arith.mulf %8, %8 : vector<64x128xf32>
    %cst_6 = arith.constant dense<0.000000e+00> : vector<64xf32>
    %10 = vector.multi_reduction <add>, %9, %cst_6 [1] : vector<64x128xf32> to vector<64xf32>
    %11 = vector.shape_cast %10 : vector<64xf32> to vector<64x1xf32>
    %cst_7 = arith.constant 1.280000e+02 : f32
    %12 = vector.broadcast %cst_7 : f32 to vector<64x1xf32>
    %13 = arith.divf %11, %12 : vector<64x1xf32>
    %cst_8 = arith.constant 9.99999974E-6 : f32
    %14 = vector.broadcast %cst_8 : f32 to vector<64x1xf32>
    %15 = arith.addf %13, %14 : vector<64x1xf32>
    %16 = math.rsqrt %15 : vector<64x1xf32>
    %17 = vector.broadcast %16 : vector<64x1xf32> to vector<64x128xf32>
    %18 = vector.broadcast %1 : vector<1x128xf32> to vector<64x128xf32>
    %19 = arith.mulf %17, %18 : vector<64x128xf32>
    %20 = arith.mulf %8, %19 : vector<64x128xf32>
    %21 = vector.broadcast %2 : vector<1x128xf32> to vector<64x128xf32>
    %22 = arith.addf %20, %21 : vector<64x128xf32>
    %c0_9 = arith.constant 0 : index
    %c0_10 = arith.constant 0 : index
    %23 = vector.load %arg4[%c0_9, %c0_10] : memref<64x128xf32, #tpu.memory_space<vmem>>, vector<64x128xf32>
    tpu.vector_store %arg4[%c0_9, %c0_10], %22 {strides = array<i32>} : memref<64x128xf32, #tpu.memory_space<vmem>>, vector<64x128xf32>,
    return
  }
  func.func @transform_0(%arg0: i32) -> (i32, i32) {
    %c0_i32 = arith.constant 0 : i32
    %c0_i32_0 = arith.constant 0 : i32
    return %arg0, %c0_i32 : i32, i32
  }
  func.func @transform_1(%arg0: i32) -> (i32, i32) {
    %c0_i32 = arith.constant 0 : i32
    %c0_i32_0 = arith.constant 0 : i32
    %c0_i32_1 = arith.constant 0 : i32
    return %c0_i32, %c0_i32_0 : i32, i32
  }
  func.func @transform_2(%arg0: i32) -> (i32, i32) {
    %c0_i32 = arith.constant 0 : i32
    %c0_i32_0 = arith.constant 0 : i32
    %c0_i32_1 = arith.constant 0 : i32
    return %c0_i32, %c0_i32_0 : i32, i32
  }
  func.func @transform_3(%arg0: i32) -> (i32, i32) {
    %c0_i32 = arith.constant 0 : i32
    %c0_i32_0 = arith.constant 0 : i32
    return %arg0, %c0_i32 : i32, i32
  }
}

</mosaic_0001>

<llo_original>
// kernel: tpu_custom_call.1
$region0: #{tpu_custom_call.1}
  #allocation0 [shape = 'u32[]', space=smem, size = 0x4, offset = 0x4, fixed_abs, tag = 'smem constant byte address 0x4 - core index']
  #allocation1 [shape = 'u32[144,128]{1,0:T(1,128)}', space=vmem, size = 0x12000, scoped, tag = 'internal scratch']
  %s0 = inlined_call_operand.hbm [shape: f32[64,128], index: 0, kind: input, shape index: {}]
  %s1 = inlined_call_operand.vmem [shape: f32[1,128], index: 1, kind: input, shape index: {}]
  %s2 = inlined_call_operand.vmem [shape: f32[1,128], index: 2, kind: input, shape index: {}]
  %s3 = inlined_call_operand.hbm [shape: f32[64,128], index: 3, kind: output, shape index: {}]
  %s4 = sld [smem:[#allocation0]]
  $region26: #{tpu_custom_call.1} parent=0
    _
  %s6 = ssub.s32 1, %s4
  %s7 = scalar_select 0, %s6, %s4
  $region1: #{tpu_custom_call.1} parent=0
    #allocation2 [shape = 'u8[32768]{0}', space=vmem, size = 0x8000, scoped, tag = 'input window, operand 0, single buffered']
    #allocation3 [shape = 's32[1]{0}', space=sflag, size = 0x4, scoped, tag = 'scoped memory for tpu_custom_call.1']
    #allocation4 [shape = 's32[1]{0}', space=sflag, size = 0x4, scoped, tag = 'scoped memory for tpu_custom_call.1']
    #allocation5 [shape = 'u8[32768]{0}', space=vmem, size = 0x8000, scoped, tag = 'output window, operand 0, single buffered']
    %8 = vsyncpa [#allocation3], 0
    %9 = vsyncpa [#allocation4], 0
    // Predicated region
    $region2: #{tpu_custom_call.1} parent=1 // pred_check
      _
    $region3: #{tpu_custom_call.1} parent=1 // pred_check_branch
      %11 = sbr.rel (0) target = $region5
    $region4: #{tpu_custom_call.1} parent=1 // pred_region
      %s13 = ssub.s32 1024, 1024
      %14 = vsyncadd [#allocation3], %s13
      %s15 = sshll.u32 [#allocation2], 4
      %s16 = int_to_ptr.vmem [resolvable:$true] %s15
      %21 = dma.hbm_to_vmem [thread:$0]  %s0, 1024, %s16, [#allocation3], 128, 128, 8
    $region5: #{tpu_custom_call.1} parent=1 // pred_fallthru
      _
    // Predicated region
    $region6: #{tpu_custom_call.1} parent=1 // pred_check
      _
    $region7: #{tpu_custom_call.1} parent=1 // pred_check_branch
      %23 = sbr.rel (0) target = $region9
    $region8: #{tpu_custom_call.1} parent=1 // pred_region
      _
    $region9: #{tpu_custom_call.1} parent=1 // pred_fallthru
      _
    // Predicated region
    $region10: #{tpu_custom_call.1} parent=1 // pred_check
      _
    $region11: #{tpu_custom_call.1} parent=1 // pred_check_branch
      %25 = sbr.rel (0) target = $region13
    $region12: #{tpu_custom_call.1} parent=1 // pred_region
      _
    $region13: #{tpu_custom_call.1} parent=1 // pred_fallthru
      _
    // Predicated region
    $region14: #{tpu_custom_call.1} parent=1 // pred_check
      _
    $region15: #{tpu_custom_call.1} parent=1 // pred_check_branch
      %27 = sbr.rel (0) target = $region17
    $region16: #{tpu_custom_call.1} parent=1 // pred_region
      %28 = dma.done [#allocation3], 1024
    $region17: #{tpu_custom_call.1} parent=1 // pred_fallthru
      _
    %v29 = vld [vmem:[#allocation2] sm:$0xff]
    %v30 = vld [vmem:[#allocation2 + $0x8] sm:$0xff]
    %v31 = vld [vmem:[#allocation2 + $0x10] sm:$0xff]
    %v32 = vld [vmem:[#allocation2 + $0x18] sm:$0xff]
    %v33 = vld [vmem:[#allocation2 + $0x20] sm:$0xff]
    %v34 = vld [vmem:[#allocation2 + $0x28] sm:$0xff]
    %v35 = vld [vmem:[#allocation2 + $0x30] sm:$0xff]
    %v36 = vld [vmem:[#allocation2 + $0x38] sm:$0xff]
    %v37 = vld [vmem:[%s1] sm:$0x1]
    %v38 = vld [vmem:[%s2] sm:$0x1]
    %39 = vadd.xlane.f32.xlu0 %v29
    %v40 = vpop.xlane.xlu0 %39
    %41 = vadd.xlane.f32.xlu0 %v30
    %v42 = vpop.xlane.xlu0 %41
    %43 = vadd.xlane.f32.xlu0 %v31
    %v44 = vpop.xlane.xlu0 %43
    %45 = vadd.xlane.f32.xlu0 %v32
    %v46 = vpop.xlane.xlu0 %45
    %47 = vadd.xlane.f32.xlu0 %v33
    %v48 = vpop.xlane.xlu0 %47
    %49 = vadd.xlane.f32.xlu0 %v34
    %v50 = vpop.xlane.xlu0 %49
    %51 = vadd.xlane.f32.xlu0 %v35
    %v52 = vpop.xlane.xlu0 %51
    %53 = vadd.xlane.f32.xlu0 %v36
    %v54 = vpop.xlane.xlu0 %53
    %v55 = vrcp.pop 128.0
    %v56 = vmul.f32 %v40, %v55
    %v57 = vmul.f32 %v42, %v55
    %v58 = vmul.f32 %v44, %v55
    %v59 = vmul.f32 %v46, %v55
    %v60 = vmul.f32 %v48, %v55
    %v61 = vmul.f32 %v50, %v55
    %v62 = vmul.f32 %v52, %v55
    %v63 = vmul.f32 %v54, %v55
    %v64 = vsub.f32 %v29, %v56
    %v65 = vsub.f32 %v30, %v57
    %v66 = vsub.f32 %v31, %v58
    %v67 = vsub.f32 %v32, %v59
    %v68 = vsub.f32 %v33, %v60
    %v69 = vsub.f32 %v34, %v61
    %v70 = vsub.f32 %v35, %v62
    %v71 = vsub.f32 %v36, %v63
    %v72 = vmul.f32 %v64, %v64
    %v73 = vmul.f32 %v65, %v65
    %v74 = vmul.f32 %v66, %v66
    %v75 = vmul.f32 %v67, %v67
    %v76 = vmul.f32 %v68, %v68
    %v77 = vmul.f32 %v69, %v69
    %v78 = vmul.f32 %v70, %v70
    %v79 = vmul.f32 %v71, %v71
    %80 = vadd.xlane.f32.xlu0 %v72
    %v81 = vpop.xlane.xlu0 %80
    %82 = vadd.xlane.f32.xlu0 %v73
    %v83 = vpop.xlane.xlu0 %82
    %84 = vadd.xlane.f32.xlu0 %v74
    %v85 = vpop.xlane.xlu0 %84
    %86 = vadd.xlane.f32.xlu0 %v75
    %v87 = vpop.xlane.xlu0 %86
    %88 = vadd.xlane.f32.xlu0 %v76
    %v89 = vpop.xlane.xlu0 %88
    %90 = vadd.xlane.f32.xlu0 %v77
    %v91 = vpop.xlane.xlu0 %90
    %92 = vadd.xlane.f32.xlu0 %v78
    %v93 = vpop.xlane.xlu0 %92
    %94 = vadd.xlane.f32.xlu0 %v79
    %v95 = vpop.xlane.xlu0 %94
    %v96 = vmul.f32 %v81, %v55
    %v97 = vmul.f32 %v83, %v55
    %v98 = vmul.f32 %v85, %v55
    %v99 = vmul.f32 %v87, %v55
    %v100 = vmul.f32 %v89, %v55
    %v101 = vmul.f32 %v91, %v55
    %v102 = vmul.f32 %v93, %v55
    %v103 = vmul.f32 %v95, %v55
    %v104 = vadd.f32 %v96, 1e-05
    %v105 = vadd.f32 %v97, 1e-05
    %v106 = vadd.f32 %v98, 1e-05
    %v107 = vadd.f32 %v99, 1e-05
    %v108 = vadd.f32 %v100, 1e-05
    %v109 = vadd.f32 %v101, 1e-05
    %v110 = vadd.f32 %v102, 1e-05
    %v111 = vadd.f32 %v103, 1e-05
    %v112 = vrsqrt.pop %v104
    %v113 = vrsqrt.pop %v105
    %v114 = vrsqrt.pop %v106
    %v115 = vrsqrt.pop %v107
    %v116 = vrsqrt.pop %v108
    %v117 = vrsqrt.pop %v109
    %v118 = vrsqrt.pop %v110
    %v119 = vrsqrt.pop %v111
    %v121 = vlaneseq
    %v122 = vshrl.u32 %v121, 7
    %v123 = vsub.s32 0, %v122
    %v124 = vrot.slane %v37, %v123
    %v126 = vmul.f32 %v112, %v124
    %v127 = vmul.f32 %v113, %v124
    %v128 = vmul.f32 %v114, %v124
    %v129 = vmul.f32 %v115, %v124
    %v130 = vmul.f32 %v116, %v124
    %v131 = vmul.f32 %v117, %v124
    %v132 = vmul.f32 %v118, %v124
    %v133 = vmul.f32 %v119, %v124
    %v134 = vmul.f32 %v64, %v126
    %v135 = vmul.f32 %v65, %v127
    %v136 = vmul.f32 %v66, %v128
    %v137 = vmul.f32 %v67, %v129
    %v138 = vmul.f32 %v68, %v130
    %v139 = vmul.f32 %v69, %v131
    %v140 = vmul.f32 %v70, %v132
    %v141 = vmul.f32 %v71, %v133
    %v143 = vlaneseq
    %v144 = vshrl.u32 %v143, 7
    %v145 = vsub.s32 0, %v144
    %v146 = vrot.slane %v38, %v145
    %v148 = vadd.f32 %v134, %v146
    %v149 = vadd.f32 %v135, %v146
    %v150 = vadd.f32 %v136, %v146
    %v151 = vadd.f32 %v137, %v146
    %v152 = vadd.f32 %v138, %v146
    %v153 = vadd.f32 %v139, %v146
    %v154 = vadd.f32 %v140, %v146
    %v155 = vadd.f32 %v141, %v146
    %156 = vst [vmem:[#allocation5] sm:$0xff] %v148
    %157 = vst [vmem:[#allocation5 + $0x8] sm:$0xff] %v149
    %158 = vst [vmem:[#allocation5 + $0x10] sm:$0xff] %v150
    %159 = vst [vmem:[#allocation5 + $0x18] sm:$0xff] %v151
    %160 = vst [vmem:[#allocation5 + $0x20] sm:$0xff] %v152
    %161 = vst [vmem:[#allocation5 + $0x28] sm:$0xff] %v153
    %162 = vst [vmem:[#allocation5 + $0x30] sm:$0xff] %v154
    %163 = vst [vmem:[#allocation5 + $0x38] sm:$0xff] %v155
    // Predicated region
    $region18: #{tpu_custom_call.1} parent=1 // pred_check
      _
    $region19: #{tpu_custom_call.1} parent=1 // pred_check_branch
      %165 = sbr.rel (0) target = $region21
    $region20: #{tpu_custom_call.1} parent=1 // pred_region
      %s167 = ssub.s32 1024, 1024
      %168 = vsyncadd [#allocation4], %s167
      %s169 = sshll.u32 [#allocation5], 4
      %s170 = int_to_ptr.vmem [resolvable:$true] %s169
      %175 = dma.vmem_to_hbm [thread:$0]  %s170, 1024, %s3, [#allocation4], 128, 128, 8
    $region21: #{tpu_custom_call.1} parent=1 // pred_fallthru
      _
    // Predicated region
    $region22: #{tpu_custom_call.1} parent=1 // pred_check
      _
    $region23: #{tpu_custom_call.1} parent=1 // pred_check_branch
      %177 = sbr.rel (0) target = $region25
    $region24: #{tpu_custom_call.1} parent=1 // pred_region
      %178 = dma.done [#allocation4], 1024
    $region25: #{tpu_custom_call.1} parent=1 // pred_fallthru
      _
    %179 = vsyncpa [#allocation3], 1
    %180 = vsyncpa [#allocation4], 1

</llo_original>
